<compile_context>
chip_gen: v7x
topology: tpu7x:2x2x1
jax: 0.10.0
libtpu: 0.0.40
codegen_flags: <defaults>
</compile_context>

<pallas_src>
import jax
import jax.numpy as jnp
from jax.experimental import pallas as pl
from jax.experimental.pallas import tpu as pltpu

IN_FEATURES = 99 * 4      # 396
HIDDEN = 64
OUT_FEATURES = 10


def _round_up(n, m):
    return ((n + m - 1) // m) * m


def _has_two_tensorcores():
    """Only v7x has 2 TensorCores per chip; v5e/v6e grids are serial loops."""
    try:
        kind = jax.devices()[0].device_kind.lower()
        return "v7" in kind
    except Exception:  # pragma: no cover - defensive, default to no split
        return False


def _mlp_kernel(x_ref, w1_ref, b1_ref, w2_ref, b2_ref, w3_ref, b3_ref,
                w4_ref, b4_ref, o_ref):
    act_dtype = w1_ref.dtype                     # bf16 MXU-input dtype
    x = x_ref[...].astype(act_dtype)             # in-kernel cast (f32 -> bf16)

    h = jnp.dot(x, w1_ref[...], preferred_element_type=jnp.float32) + b1_ref[...]
    h = jnp.maximum(h, 0.0).astype(act_dtype)

    h = jnp.dot(h, w2_ref[...], preferred_element_type=jnp.float32) + b2_ref[...]
    h = jnp.maximum(h, 0.0).astype(act_dtype)

    h = jnp.dot(h, w3_ref[...], preferred_element_type=jnp.float32) + b3_ref[...]
    h = jnp.maximum(h, 0.0).astype(act_dtype)

    logits = jnp.dot(h, w4_ref[...], preferred_element_type=jnp.float32) + b4_ref[...]

    # sigmoid(x) = 1 / (1 + exp(-x)); exp and approx reciprocal both on EUP.
    o_ref[...] = pl.reciprocal(1.0 + jnp.exp(-logits), approx=True).astype(o_ref.dtype)


def prepare_params(params, compute_dtype=jnp.bfloat16):
    """One-time layout/dtype prep: weights -> bf16, biases -> f32 row vectors."""
    prepared = []
    for w, b in params:
        prepared.append((jnp.asarray(w, compute_dtype),
                         jnp.asarray(b, jnp.float32).reshape(1, -1)))
    return prepared


def net_forward(x, prepared_params, *, max_batch_tile=1024):
    """Fused MLP forward.  x: (B, 396) float32.  Returns (B, 10) float32.

    prepared_params: output of prepare_params() (bf16 weights, f32 biases).
    """
    (w1, b1), (w2, b2), (w3, b3), (w4, b4) = prepared_params
    B, F = x.shape
    assert F == IN_FEATURES

    # ---- batch tile: as large as allowed; split only on 2-TC chips ----
    tile = min(max_batch_tile, _round_up(B, 16))
    if _has_two_tensorcores() and B >= 32 and pl.cdiv(B, tile) < 2:
        tile = max(16, _round_up(pl.cdiv(B, 2), 16))
    grid = (pl.cdiv(B, tile),)                   # ragged last block handled by Pallas

    def resident(arr):
        # full array, same block every grid step -> stays resident in VMEM
        return pl.BlockSpec(arr.shape, lambda i, _nd=arr.ndim: (0,) * _nd)

    weight_bytes = sum(int(w.size) * w.dtype.itemsize + int(b.size) * b.dtype.itemsize
                       for w, b in prepared_params)
    cost = pl.CostEstimate(
        flops=2 * B * (IN_FEATURES * HIDDEN + 2 * HIDDEN * HIDDEN
                       + HIDDEN * OUT_FEATURES),
        transcendentals=B * OUT_FEATURES,
        bytes_accessed=B * IN_FEATURES * 4 + B * OUT_FEATURES * 4 + weight_bytes,
    )

    out = pl.pallas_call(
        _mlp_kernel,
        out_shape=jax.ShapeDtypeStruct((B, OUT_FEATURES), jnp.float32),
        grid_spec=pltpu.PrefetchScalarGridSpec(
            num_scalar_prefetch=0,
            grid=grid,
            in_specs=[
                pl.BlockSpec((tile, IN_FEATURES), lambda i: (i, 0)),
                resident(w1), resident(b1),
                resident(w2), resident(b2),
                resident(w3), resident(b3),
                resident(w4), resident(b4),
            ],
            out_specs=pl.BlockSpec((tile, OUT_FEATURES), lambda i: (i, 0)),
        ),
        compiler_params=pltpu.CompilerParams(
            dimension_semantics=("parallel",)),
        cost_estimate=cost,
    )(x, w1, b1, w2, b2, w3, b3, w4, b4)
    return out


def init_params(key):
    """Deterministic init matching PyTorch nn.Linear default:
    U(-1/sqrt(fan_in), 1/sqrt(fan_in)) for both weight and bias.  f32."""
    dims = [(IN_FEATURES, HIDDEN), (HIDDEN, HIDDEN),
            (HIDDEN, HIDDEN), (HIDDEN, OUT_FEATURES)]
    params = []
    for fan_in, fan_out in dims:
        key, kw, kb = jax.random.split(key, 3)
        bound = 1.0 / jnp.sqrt(float(fan_in))
        w = jax.random.uniform(kw, (fan_in, fan_out), jnp.float32,
                               minval=-bound, maxval=bound)
        b = jax.random.uniform(kb, (1, fan_out), jnp.float32,
                               minval=-bound, maxval=bound)
        params.append((w, b))
    return params


def _reference(x, params):
    """Plain-JAX f32 reference for sanity checking."""
    (w1, b1), (w2, b2), (w3, b3), (w4, b4) = params
    h = jnp.maximum(x @ w1 + b1, 0.0)
    h = jnp.maximum(h @ w2 + b2, 0.0)
    h = jnp.maximum(h @ w3 + b3, 0.0)
    return jax.nn.sigmoid(h @ w4 + b4)


if __name__ == "__main__":
    key = jax.random.PRNGKey(0)
    key, kx = jax.random.split(key)

    B = 64
    x = jax.random.normal(kx, (B, IN_FEATURES), jnp.float32)
    params = init_params(key)
    prepared = prepare_params(params)    # cast/reshape weights exactly once

    out = net_forward(x, prepared)
    out = jax.block_until_ready(out)

    ref = _reference(x, params)
    assert out.shape == (B, OUT_FEATURES)
    # bf16 MXU inputs + approx-reciprocal sigmoid -> relaxed tolerance vs f32 ref
    max_err = float(jnp.max(jnp.abs(out - ref)))
    assert max_err < 2e-2, f"max abs err {max_err}"

    print("KERNEL_OK")
</pallas_src>

<mosaic_0001>
module attributes {stable_mosaic.version = 11 : i64} {
  func.func @_mlp_kernel(%arg0: i32, %arg1: memref<64x396xf32, #tpu.memory_space<vmem>>, %arg2: memref<396x64xbf16, #tpu.memory_space<vmem>>, %arg3: memref<1x64xf32, #tpu.memory_space<vmem>>, %arg4: memref<64x64xbf16, #tpu.memory_space<vmem>>, %arg5: memref<1x64xf32, #tpu.memory_space<vmem>>, %arg6: memref<64x64xbf16, #tpu.memory_space<vmem>>, %arg7: memref<1x64xf32, #tpu.memory_space<vmem>>, %arg8: memref<64x10xbf16, #tpu.memory_space<vmem>>, %arg9: memref<1x10xf32, #tpu.memory_space<vmem>>, %arg10: memref<64x10xf32, #tpu.memory_space<vmem>>) attributes {dimension_semantics = [#tpu.dimension_semantics<parallel>], iteration_bounds = array<i64: 1>, scalar_prefetch = 0 : i64, scratch_operands = 0 : i64, tpu.core_type = #tpu.core_type<tc>, window_params = [{transform_indices = @transform_0, window_bounds = array<i64: 64, 396>}, {pipeline_mode = #tpu.pipeline_mode<synchronous>, transform_indices = @transform_1, window_bounds = array<i64: 396, 64>}, {pipeline_mode = #tpu.pipeline_mode<synchronous>, transform_indices = @transform_2, window_bounds = array<i64: 1, 64>}, {pipeline_mode = #tpu.pipeline_mode<synchronous>, transform_indices = @transform_3, window_bounds = array<i64: 64, 64>}, {pipeline_mode = #tpu.pipeline_mode<synchronous>, transform_indices = @transform_4, window_bounds = array<i64: 1, 64>}, {pipeline_mode = #tpu.pipeline_mode<synchronous>, transform_indices = @transform_5, window_bounds = array<i64: 64, 64>}, {pipeline_mode = #tpu.pipeline_mode<synchronous>, transform_indices = @transform_6, window_bounds = array<i64: 1, 64>}, {pipeline_mode = #tpu.pipeline_mode<synchronous>, transform_indices = @transform_7, window_bounds = array<i64: 64, 10>}, {pipeline_mode = #tpu.pipeline_mode<synchronous>, transform_indices = @transform_8, window_bounds = array<i64: 1, 10>}, {transform_indices = @transform_9, window_bounds = array<i64: 64, 10>}]} {
    %c0 = arith.constant 0 : index
    %c0_0 = arith.constant 0 : index
    %0 = vector.load %arg1[%c0, %c0_0] : memref<64x396xf32, #tpu.memory_space<vmem>>, vector<64x396xf32>
    %1 = arith.truncf %0 : vector<64x396xf32> to vector<64x396xbf16>
    %c0_1 = arith.constant 0 : index
    %c0_2 = arith.constant 0 : index
    %2 = vector.load %arg2[%c0_1, %c0_2] : memref<396x64xbf16, #tpu.memory_space<vmem>>, vector<396x64xbf16>
    %cst = arith.constant dense<0.000000e+00> : vector<64x64xf32>
    %3 = tpu.matmul %1, %2, %cst {dimension_numbers = #tpu.dot_dimension_numbers<[1], [0], [0], [1], [0, 0, 1, 1], [], []>} : vector<64x396xbf16>, vector<396x64xbf16>, vector<64x64xf32> -> vector<64x64xf32>
    %c0_3 = arith.constant 0 : index
    %c0_4 = arith.constant 0 : index
    %4 = vector.load %arg3[%c0_3, %c0_4] : memref<1x64xf32, #tpu.memory_space<vmem>>, vector<1x64xf32>
    %5 = vector.broadcast %4 : vector<1x64xf32> to vector<64x64xf32>
    %6 = arith.addf %3, %5 : vector<64x64xf32>
    %cst_5 = arith.constant 0.000000e+00 : f32
    %7 = vector.broadcast %cst_5 : f32 to vector<64x64xf32>
    %8 = arith.maximumf %6, %7 : vector<64x64xf32>
    %9 = arith.truncf %8 : vector<64x64xf32> to vector<64x64xbf16>
    %c0_6 = arith.constant 0 : index
    %c0_7 = arith.constant 0 : index
    %10 = vector.load %arg4[%c0_6, %c0_7] : memref<64x64xbf16, #tpu.memory_space<vmem>>, vector<64x64xbf16>
    %cst_8 = arith.constant dense<0.000000e+00> : vector<64x64xf32>
    %11 = tpu.matmul %9, %10, %cst_8 {dimension_numbers = #tpu.dot_dimension_numbers<[1], [0], [0], [1], [0, 0, 1, 1], [], []>} : vector<64x64xbf16>, vector<64x64xbf16>, vector<64x64xf32> -> vector<64x64xf32>
    %c0_9 = arith.constant 0 : index
    %c0_10 = arith.constant 0 : index
    %12 = vector.load %arg5[%c0_9, %c0_10] : memref<1x64xf32, #tpu.memory_space<vmem>>, vector<1x64xf32>
    %13 = vector.broadcast %12 : vector<1x64xf32> to vector<64x64xf32>
    %14 = arith.addf %11, %13 : vector<64x64xf32>
    %cst_11 = arith.constant 0.000000e+00 : f32
    %15 = vector.broadcast %cst_11 : f32 to vector<64x64xf32>
    %16 = arith.maximumf %14, %15 : vector<64x64xf32>
    %17 = arith.truncf %16 : vector<64x64xf32> to vector<64x64xbf16>
    %c0_12 = arith.constant 0 : index
    %c0_13 = arith.constant 0 : index
    %18 = vector.load %arg6[%c0_12, %c0_13] : memref<64x64xbf16, #tpu.memory_space<vmem>>, vector<64x64xbf16>
    %cst_14 = arith.constant dense<0.000000e+00> : vector<64x64xf32>
    %19 = tpu.matmul %17, %18, %cst_14 {dimension_numbers = #tpu.dot_dimension_numbers<[1], [0], [0], [1], [0, 0, 1, 1], [], []>} : vector<64x64xbf16>, vector<64x64xbf16>, vector<64x64xf32> -> vector<64x64xf32>
    %c0_15 = arith.constant 0 : index
    %c0_16 = arith.constant 0 : index
    %20 = vector.load %arg7[%c0_15, %c0_16] : memref<1x64xf32, #tpu.memory_space<vmem>>, vector<1x64xf32>
    %21 = vector.broadcast %20 : vector<1x64xf32> to vector<64x64xf32>
    %22 = arith.addf %19, %21 : vector<64x64xf32>
    %cst_17 = arith.constant 0.000000e+00 : f32
    %23 = vector.broadcast %cst_17 : f32 to vector<64x64xf32>
    %24 = arith.maximumf %22, %23 : vector<64x64xf32>
    %25 = arith.truncf %24 : vector<64x64xf32> to vector<64x64xbf16>
    %c0_18 = arith.constant 0 : index
    %c0_19 = arith.constant 0 : index
    %26 = vector.load %arg8[%c0_18, %c0_19] : memref<64x10xbf16, #tpu.memory_space<vmem>>, vector<64x10xbf16>
    %cst_20 = arith.constant dense<0.000000e+00> : vector<64x10xf32>
    %27 = tpu.matmul %25, %26, %cst_20 {dimension_numbers = #tpu.dot_dimension_numbers<[1], [0], [0], [1], [0, 0, 1, 1], [], []>} : vector<64x64xbf16>, vector<64x10xbf16>, vector<64x10xf32> -> vector<64x10xf32>
    %c0_21 = arith.constant 0 : index
    %c0_22 = arith.constant 0 : index
    %28 = vector.load %arg9[%c0_21, %c0_22] : memref<1x10xf32, #tpu.memory_space<vmem>>, vector<1x10xf32>
    %29 = vector.broadcast %28 : vector<1x10xf32> to vector<64x10xf32>
    %30 = arith.addf %27, %29 : vector<64x10xf32>
    %cst_23 = arith.constant 0.000000e+00 : f32
    %31 = vector.broadcast %cst_23 : f32 to vector<64x10xf32>
    %32 = arith.subf %31, %30 : vector<64x10xf32>
    %33 = math.exp %32 : vector<64x10xf32>
    %cst_24 = arith.constant 1.000000e+00 : f32
    %34 = vector.broadcast %cst_24 : f32 to vector<64x10xf32>
    %35 = arith.addf %34, %33 : vector<64x10xf32>
    %36 = tpu.reciprocal %35 {approx = true} : vector<64x10xf32> -> vector<64x10xf32>
    %c0_25 = arith.constant 0 : index
    %c0_26 = arith.constant 0 : index
    %37 = vector.load %arg10[%c0_25, %c0_26] : memref<64x10xf32, #tpu.memory_space<vmem>>, vector<64x10xf32>
    tpu.vector_store %arg10[%c0_25, %c0_26], %36 {strides = array<i32>} : memref<64x10xf32, #tpu.memory_space<vmem>>, vector<64x10xf32>,
    return
  }
  func.func @transform_0(%arg0: i32) -> (i32, i32) {
    %c0_i32 = arith.constant 0 : i32
    %c0_i32_0 = arith.constant 0 : i32
    return %arg0, %c0_i32 : i32, i32
  }
  func.func @transform_1(%arg0: i32) -> (i32, i32) {
    %c0_i32 = arith.constant 0 : i32
    %c0_i32_0 = arith.constant 0 : i32
    %c0_i32_1 = arith.constant 0 : i32
    return %c0_i32, %c0_i32_0 : i32, i32
  }
  func.func @transform_2(%arg0: i32) -> (i32, i32) {
    %c0_i32 = arith.constant 0 : i32
    %c0_i32_0 = arith.constant 0 : i32
    %c0_i32_1 = arith.constant 0 : i32
    return %c0_i32, %c0_i32_0 : i32, i32
  }
  func.func @transform_3(%arg0: i32) -> (i32, i32) {
    %c0_i32 = arith.constant 0 : i32
    %c0_i32_0 = arith.constant 0 : i32
    %c0_i32_1 = arith.constant 0 : i32
    return %c0_i32, %c0_i32_0 : i32, i32
  }
  func.func @transform_4(%arg0: i32) -> (i32, i32) {
    %c0_i32 = arith.constant 0 : i32
    %c0_i32_0 = arith.constant 0 : i32
    %c0_i32_1 = arith.constant 0 : i32
    return %c0_i32, %c0_i32_0 : i32, i32
  }
  func.func @transform_5(%arg0: i32) -> (i32, i32) {
    %c0_i32 = arith.constant 0 : i32
    %c0_i32_0 = arith.constant 0 : i32
    %c0_i32_1 = arith.constant 0 : i32
    return %c0_i32, %c0_i32_0 : i32, i32
  }
  func.func @transform_6(%arg0: i32) -> (i32, i32) {
    %c0_i32 = arith.constant 0 : i32
    %c0_i32_0 = arith.constant 0 : i32
    %c0_i32_1 = arith.constant 0 : i32
    return %c0_i32, %c0_i32_0 : i32, i32
  }
  func.func @transform_7(%arg0: i32) -> (i32, i32) {
    %c0_i32 = arith.constant 0 : i32
    %c0_i32_0 = arith.constant 0 : i32
    %c0_i32_1 = arith.constant 0 : i32
    return %c0_i32, %c0_i32_0 : i32, i32
  }
  func.func @transform_8(%arg0: i32) -> (i32, i32) {
    %c0_i32 = arith.constant 0 : i32
    %c0_i32_0 = arith.constant 0 : i32
    %c0_i32_1 = arith.constant 0 : i32
    return %c0_i32, %c0_i32_0 : i32, i32
  }
  func.func @transform_9(%arg0: i32) -> (i32, i32) {
    %c0_i32 = arith.constant 0 : i32
    %c0_i32_0 = arith.constant 0 : i32
    return %arg0, %c0_i32 : i32, i32
  }
}

</mosaic_0001>

<llo_original>
// kernel: tpu_custom_call.1
$region0: #{tpu_custom_call.1}
  #allocation0 [shape = 'u32[]', space=smem, size = 0x4, offset = 0x4, fixed_abs, tag = 'smem constant byte address 0x4 - core index']
  #allocation1 [shape = 'u32[144,128]{1,0:T(1,128)}', space=vmem, size = 0x12000, scoped, tag = 'internal scratch']
  %s0 = inlined_call_operand.vmem [shape: f32[64,396], index: 0, kind: input, shape index: {}]
  %s1 = inlined_call_operand.vmem [shape: bf16[396,64], index: 1, kind: input, shape index: {}]
  %s2 = inlined_call_operand.vmem [shape: f32[1,64], index: 2, kind: input, shape index: {}]
  %s3 = inlined_call_operand.vmem [shape: bf16[64,64], index: 3, kind: input, shape index: {}]
  %s4 = inlined_call_operand.vmem [shape: f32[1,64], index: 4, kind: input, shape index: {}]
  %s5 = inlined_call_operand.vmem [shape: bf16[64,64], index: 5, kind: input, shape index: {}]
  %s6 = inlined_call_operand.vmem [shape: f32[1,64], index: 6, kind: input, shape index: {}]
  %s7 = inlined_call_operand.vmem [shape: bf16[64,10], index: 7, kind: input, shape index: {}]
  %s8 = inlined_call_operand.vmem [shape: f32[1,10], index: 8, kind: input, shape index: {}]
  %s9 = inlined_call_operand.vmem [shape: f32[64,10], index: 9, kind: output, shape index: {}]
  %s10 = sld [smem:[#allocation0]]
  $region46: #{tpu_custom_call.1} parent=0
    _
  %s12 = ssub.s32 1, %s10
  %s13 = scalar_select 0, %s12, %s10
  // Predicated region
  $region2: #{tpu_custom_call.1} parent=0 // pred_check
    _
  $region3: #{tpu_custom_call.1} parent=0 // pred_check_branch
    %15 = sbr.rel (0) target = $region5
  $region4: #{tpu_custom_call.1} parent=0 // pred_region
    _
  $region5: #{tpu_custom_call.1} parent=0 // pred_fallthru
    _
  // Predicated region
  $region6: #{tpu_custom_call.1} parent=0 // pred_check
    _
  $region7: #{tpu_custom_call.1} parent=0 // pred_check_branch
    %17 = sbr.rel (0) target = $region9
  $region8: #{tpu_custom_call.1} parent=0 // pred_region
    _
  $region9: #{tpu_custom_call.1} parent=0 // pred_fallthru
    _
  // Predicated region
  $region10: #{tpu_custom_call.1} parent=0 // pred_check
    _
  $region11: #{tpu_custom_call.1} parent=0 // pred_check_branch
    %19 = sbr.rel (0) target = $region13
  $region12: #{tpu_custom_call.1} parent=0 // pred_region
    _
  $region13: #{tpu_custom_call.1} parent=0 // pred_fallthru
    _
  // Predicated region
  $region14: #{tpu_custom_call.1} parent=0 // pred_check
    _
  $region15: #{tpu_custom_call.1} parent=0 // pred_check_branch
    %21 = sbr.rel (0) target = $region17
  $region16: #{tpu_custom_call.1} parent=0 // pred_region
    _
  $region17: #{tpu_custom_call.1} parent=0 // pred_fallthru
    _
  // Predicated region
  $region18: #{tpu_custom_call.1} parent=0 // pred_check
    _
  $region19: #{tpu_custom_call.1} parent=0 // pred_check_branch
    %23 = sbr.rel (0) target = $region21
  $region20: #{tpu_custom_call.1} parent=0 // pred_region
    _
  $region21: #{tpu_custom_call.1} parent=0 // pred_fallthru
    _
  // Predicated region
  $region22: #{tpu_custom_call.1} parent=0 // pred_check
    _
  $region23: #{tpu_custom_call.1} parent=0 // pred_check_branch
    %25 = sbr.rel (0) target = $region25
  $region24: #{tpu_custom_call.1} parent=0 // pred_region
    _
  $region25: #{tpu_custom_call.1} parent=0 // pred_fallthru
    _
  // Predicated region
  $region26: #{tpu_custom_call.1} parent=0 // pred_check
    _
  $region27: #{tpu_custom_call.1} parent=0 // pred_check_branch
    %27 = sbr.rel (0) target = $region29
  $region28: #{tpu_custom_call.1} parent=0 // pred_region
    _
  $region29: #{tpu_custom_call.1} parent=0 // pred_fallthru
    _
  // Predicated region
  $region30: #{tpu_custom_call.1} parent=0 // pred_check
    _
  $region31: #{tpu_custom_call.1} parent=0 // pred_check_branch
    %29 = sbr.rel (0) target = $region33
  $region32: #{tpu_custom_call.1} parent=0 // pred_region
    _
  $region33: #{tpu_custom_call.1} parent=0 // pred_fallthru
    _
  // Predicated region
  $region34: #{tpu_custom_call.1} parent=0 // pred_check
    _
  $region35: #{tpu_custom_call.1} parent=0 // pred_check_branch
    %31 = sbr.rel (0) target = $region37
  $region36: #{tpu_custom_call.1} parent=0 // pred_region
    _
  $region37: #{tpu_custom_call.1} parent=0 // pred_fallthru
    _
  %v33 = vld [vmem:[%s0] sm:$0xff]
  %v34 = vld [vmem:[%s0 + $0x8] sm:$0xff]
  %v35 = vld [vmem:[%s0 + $0x10] sm:$0xff]
  %v36 = vld [vmem:[%s0 + $0x18] sm:$0xff]
  %v37 = vld [vmem:[%s0 + $0x20] sm:$0xff]
  %v38 = vld [vmem:[%s0 + $0x28] sm:$0xff]
  %v39 = vld [vmem:[%s0 + $0x30] sm:$0xff]
  %v40 = vld [vmem:[%s0 + $0x38] sm:$0xff]
  %v41 = vld [vmem:[%s0 + $0x40] sm:$0xff]
  %v42 = vld [vmem:[%s0 + $0x48] sm:$0xff]
  %v43 = vld [vmem:[%s0 + $0x50] sm:$0xff]
  %v44 = vld [vmem:[%s0 + $0x58] sm:$0xff]
  %v45 = vld [vmem:[%s0 + $0x60] sm:$0xff]
  %v46 = vld [vmem:[%s0 + $0x68] sm:$0xff]
  %v47 = vld [vmem:[%s0 + $0x70] sm:$0xff]
  %v48 = vld [vmem:[%s0 + $0x78] sm:$0xff]
  %v49 = vld [vmem:[%s0 + $0x80] sm:$0xff]
  %v50 = vld [vmem:[%s0 + $0x88] sm:$0xff]
  %v51 = vld [vmem:[%s0 + $0x90] sm:$0xff]
  %v52 = vld [vmem:[%s0 + $0x98] sm:$0xff]
  %v53 = vld [vmem:[%s0 + $0xa0] sm:$0xff]
  %v54 = vld [vmem:[%s0 + $0xa8] sm:$0xff]
  %v55 = vld [vmem:[%s0 + $0xb0] sm:$0xff]
  %v56 = vld [vmem:[%s0 + $0xb8] sm:$0xff]
  %v57 = vld [vmem:[%s0 + $0xc0] sm:$0xff]
  %v58 = vld [vmem:[%s0 + $0xc8] sm:$0xff]
  %v59 = vld [vmem:[%s0 + $0xd0] sm:$0xff]
  %v60 = vld [vmem:[%s0 + $0xd8] sm:$0xff]
  %v61 = vld [vmem:[%s0 + $0xe0] sm:$0xff]
  %v62 = vld [vmem:[%s0 + $0xe8] sm:$0xff]
  %v63 = vld [vmem:[%s0 + $0xf0] sm:$0xff]
  %v64 = vld [vmem:[%s0 + $0xf8] sm:$0xff]
  %v65 = vpack.c.bf16 %v37, %v33
  %v66 = vpack.c.bf16 %v38, %v34
  %v67 = vpack.c.bf16 %v39, %v35
  %v68 = vpack.c.bf16 %v40, %v36
  %v69 = vpack.c.bf16 %v45, %v41
  %v70 = vpack.c.bf16 %v46, %v42
  %v71 = vpack.c.bf16 %v47, %v43
  %v72 = vpack.c.bf16 %v48, %v44
  %v73 = vpack.c.bf16 %v53, %v49
  %v74 = vpack.c.bf16 %v54, %v50
  %v75 = vpack.c.bf16 %v55, %v51
  %v76 = vpack.c.bf16 %v56, %v52
  %v77 = vpack.c.bf16 %v61, %v57
  %v78 = vpack.c.bf16 %v62, %v58
  %v79 = vpack.c.bf16 %v63, %v59
  %v80 = vpack.c.bf16 %v64, %v60
  %v81 = vld [vmem:[%s1] sm:$0xf]
  %v82 = vld [vmem:[%s1 + $0x4] sm:$0xf]
  %v83 = vld [vmem:[%s1 + $0x8] sm:$0xf]
  %v84 = vld [vmem:[%s1 + $0xc] sm:$0xf]
  %v85 = vld [vmem:[%s1 + $0x10] sm:$0xf]
  %v86 = vld [vmem:[%s1 + $0x14] sm:$0xf]
  %v87 = vld [vmem:[%s1 + $0x18] sm:$0xf]
  %v88 = vld [vmem:[%s1 + $0x1c] sm:$0xf]
  %v89 = vld [vmem:[%s1 + $0x20] sm:$0xf]
  %v90 = vld [vmem:[%s1 + $0x24] sm:$0xf]
  %v91 = vld [vmem:[%s1 + $0x28] sm:$0xf]
  %v92 = vld [vmem:[%s1 + $0x2c] sm:$0xf]
  %v93 = vld [vmem:[%s1 + $0x30] sm:$0xf]
  %v94 = vld [vmem:[%s1 + $0x34] sm:$0xf]
  %v95 = vld [vmem:[%s1 + $0x38] sm:$0xf]
  %v96 = vld [vmem:[%s1 + $0x3c] sm:$0xf]
  %v97 = vld [vmem:[%s1 + $0x40] sm:$0xf]
  %v98 = vld [vmem:[%s1 + $0x44] sm:$0xf]
  %v99 = vld [vmem:[%s1 + $0x48] sm:$0xf]
  %v100 = vld [vmem:[%s1 + $0x4c] sm:$0xf]
  %v101 = vld [vmem:[%s1 + $0x50] sm:$0xf]
  %v102 = vld [vmem:[%s1 + $0x54] sm:$0xf]
  %v103 = vld [vmem:[%s1 + $0x58] sm:$0xf]
  %v104 = vld [vmem:[%s1 + $0x5c] sm:$0xf]
  %v105 = vld [vmem:[%s1 + $0x60] sm:$0xf]
  %v106 = vld [vmem:[%s1 + $0x64] sm:$0xf]
  %v107 = vld [vmem:[%s1 + $0x68] sm:$0xf]
  %v108 = vld [vmem:[%s1 + $0x6c] sm:$0xf]
  %v109 = vld [vmem:[%s1 + $0x70] sm:$0xf]
  %v110 = vld [vmem:[%s1 + $0x74] sm:$0xf]
  %v111 = vld [vmem:[%s1 + $0x78] sm:$0xf]
  %v112 = vld [vmem:[%s1 + $0x7c] sm:$0xf]
  %v113 = vld [vmem:[%s1 + $0x80] sm:$0xf]
  %v114 = vld [vmem:[%s1 + $0x84] sm:$0xf]
  %v115 = vld [vmem:[%s1 + $0x88] sm:$0xf]
  %v116 = vld [vmem:[%s1 + $0x8c] sm:$0xf]
  %v117 = vld [vmem:[%s1 + $0x90] sm:$0xf]
  %v118 = vld [vmem:[%s1 + $0x94] sm:$0xf]
  %v119 = vld [vmem:[%s1 + $0x98] sm:$0xf]
  %v120 = vld [vmem:[%s1 + $0x9c] sm:$0xf]
  %v121 = vld [vmem:[%s1 + $0xa0] sm:$0xf]
  %v122 = vld [vmem:[%s1 + $0xa4] sm:$0xf]
  %v123 = vld [vmem:[%s1 + $0xa8] sm:$0xf]
  %v124 = vld [vmem:[%s1 + $0xac] sm:$0xf]
  %v125 = vld [vmem:[%s1 + $0xb0] sm:$0xf]
  %v126 = vld [vmem:[%s1 + $0xb4] sm:$0xf]
  %v127 = vld [vmem:[%s1 + $0xb8] sm:$0xf]
  %v128 = vld [vmem:[%s1 + $0xbc] sm:$0xf]
  %v129 = vld [vmem:[%s1 + $0xc0] sm:$0xf]
  %v130 = vld [vmem:[%s1 + $0xc4] sm:$0x3]
  %v131 = vld [vmem:[%s2] sm:$0x1]
  %v133 = vlaneseq
  %v134 = vshrl.u32 %v133, 7
  %v135 = vsub.s32 0, %v134
  %v136 = vrot.slane %v131, %v135
  %v188 = vunpack.c.l.b16 %v81
  %v189 = vunpack.c.l.b16 %v82
  %v190 = vunpack.c.l.b16 %v83
  %v191 = vunpack.c.l.b16 %v84
  %v192 = vunpack.c.l.b16 %v85
  %v193 = vunpack.c.l.b16 %v86
  %v194 = vunpack.c.l.b16 %v87
  %v195 = vunpack.c.l.b16 %v88
  %v196 = vunpack.c.l.b16 %v89
  %v197 = vunpack.c.l.b16 %v90
  %v198 = vunpack.c.l.b16 %v91
  %v199 = vunpack.c.l.b16 %v92
  %v200 = vunpack.c.l.b16 %v93
  %v201 = vunpack.c.l.b16 %v94
  %v202 = vunpack.c.l.b16 %v95
  %v203 = vunpack.c.l.b16 %v96
  %v204 = vunpack.c.l.b16 %v97
  %v205 = vunpack.c.l.b16 %v98
  %v206 = vunpack.c.l.b16 %v99
  %v207 = vunpack.c.l.b16 %v100
  %v208 = vunpack.c.l.b16 %v101
  %v209 = vunpack.c.l.b16 %v102
  %v210 = vunpack.c.l.b16 %v103
  %v211 = vunpack.c.l.b16 %v104
  %v212 = vunpack.c.l.b16 %v105
  %v213 = vunpack.c.l.b16 %v106
  %v214 = vunpack.c.l.b16 %v107
  %v215 = vunpack.c.l.b16 %v108
  %v216 = vunpack.c.l.b16 %v109
  %v217 = vunpack.c.l.b16 %v110
  %v218 = vunpack.c.l.b16 %v111
  %v219 = vunpack.c.l.b16 %v112
  %v220 = vunpack.c.l.b16 %v113
  %v221 = vunpack.c.l.b16 %v114
  %v222 = vunpack.c.l.b16 %v115
  %v223 = vunpack.c.l.b16 %v116
  %v224 = vunpack.c.l.b16 %v117
  %v225 = vunpack.c.l.b16 %v118
  %v226 = vunpack.c.l.b16 %v119
  %v227 = vunpack.c.l.b16 %v120
  %v228 = vunpack.c.l.b16 %v121
  %v229 = vunpack.c.l.b16 %v122
  %v230 = vunpack.c.l.b16 %v123
  %v231 = vunpack.c.l.b16 %v124
  %v232 = vunpack.c.l.b16 %v125
  %v233 = vunpack.c.l.b16 %v126
  %v234 = vunpack.c.l.b16 %v127
  %v235 = vunpack.c.l.b16 %v128
  %v236 = vunpack.c.l.b16 %v129
  %v237 = vunpack.c.l.b16 %v130
  %v238 = vpack.c.b16 %v189, %v188
  %v239 = vpack.c.b16 %v191, %v190
  %v240 = vpack.c.b16 %v193, %v192
  %v241 = vpack.c.b16 %v195, %v194
  %v242 = vpack.c.b16 %v197, %v196
  %v243 = vpack.c.b16 %v199, %v198
  %v244 = vpack.c.b16 %v201, %v200
  %v245 = vpack.c.b16 %v203, %v202
  %v246 = vpack.c.b16 %v205, %v204
  %v247 = vpack.c.b16 %v207, %v206
  %v248 = vpack.c.b16 %v209, %v208
  %v249 = vpack.c.b16 %v211, %v210
  %v250 = vpack.c.b16 %v213, %v212
  %v251 = vpack.c.b16 %v215, %v214
  %v252 = vpack.c.b16 %v217, %v216
  %v253 = vpack.c.b16 %v219, %v218
  %v254 = vpack.c.b16 %v221, %v220
  %v255 = vpack.c.b16 %v223, %v222
  %v256 = vpack.c.b16 %v225, %v224
  %v257 = vpack.c.b16 %v227, %v226
  %v258 = vpack.c.b16 %v229, %v228
  %v259 = vpack.c.b16 %v231, %v230
  %v260 = vpack.c.b16 %v233, %v232
  %v261 = vpack.c.b16 %v235, %v234
  %v262 = vpack.c.b16 %v237, %v236
  %vm287 = vcmask 97280
  %v289 = vsel %vm287, %v68, 0
  %v292 = vsel %vm287, %v72, 0
  %v295 = vsel %vm287, %v76, 0
  %v298 = vsel %vm287, %v80, 0
  %vm300 = vcmask 1045504
  %v302 = vsel %vm300, %v262, 0
  %304 = vmatprep.subr.bf16.mxu0 0
  %305 = vmatpush1.bf16.msra.mxu0 %v238
  %306 = vmatprep.subr.bf16.mxu0 0
  %307 = vmatpush1.bf16.msra.mxu0 %v239
  %308 = vmatprep.subr.bf16.mxu0 0
  %309 = vmatpush1.bf16.msra.mxu0 %v240
  %310 = vmatprep.subr.bf16.mxu0 0
  %311 = vmatpush1.bf16.msra.mxu0 %v241
  %312 = vmatprep.subr.bf16.mxu0 0
  %313 = vmatpush1.bf16.msra.mxu0 %v242
  %314 = vmatprep.subr.bf16.mxu0 0
  %315 = vmatpush1.bf16.msra.mxu0 %v243
  %316 = vmatprep.subr.bf16.mxu0 0
  %317 = vmatpush1.bf16.msra.mxu0 %v244
  %318 = vmatprep.subr.bf16.mxu0 0
  %319 = vmatpush1.bf16.msra.mxu0 %v245
  %320 = vmatprep.subr.bf16.mxu0 0
  %321 = vmatpush1.bf16.msra.mxu0 %v246
  %322 = vmatprep.subr.bf16.mxu0 0
  %323 = vmatpush1.bf16.msra.mxu0 %v247
  %324 = vmatprep.subr.bf16.mxu0 0
  %325 = vmatpush1.bf16.msra.mxu0 %v248
  %326 = vmatprep.subr.bf16.mxu0 0
  %327 = vmatpush1.bf16.msra.mxu0 %v249
  %328 = vmatprep.subr.bf16.mxu0 0
  %329 = vmatpush1.bf16.msra.mxu0 %v250
  %330 = vmatprep.subr.bf16.mxu0 0
  %331 = vmatpush1.bf16.msra.mxu0 %v251
  %332 = vmatprep.subr.bf16.mxu0 0
  %333 = vmatpush1.bf16.msra.mxu0 %v252
  %334 = vmatprep.subr.bf16.mxu0 0
  %335 = vmatpush1.bf16.msra.mxu0 %v253
  %336 = vmatprep.mubr.bf16.mxu0 %v66
  %337 = vmatmul.mubr.bf16.gmra.mrb[0].mxu0 %v65
  %v338 = vpop.f32.mrb[0].mxu0
  %v339 = vadd.f32 %v136, %v338
  %v340 = vpop.f32.mrb[0].mxu0
  %v341 = vpop.f32.mrb[0].mxu0
  %v342 = vadd.f32 %v136, %v341
  %v343 = vpop.f32.mrb[0].mxu0
  %344 = vmatprep.mubr.bf16.mxu0 %v70
  %345 = vmatmul.mubr.bf16.gmra.mrb[0].mxu0 %v69
  %v346 = vpop.f32.mrb[0].mxu0
  %v347 = vadd.f32 %v136, %v346
  %v348 = vpop.f32.mrb[0].mxu0
  %v349 = vpop.f32.mrb[0].mxu0
  %v350 = vadd.f32 %v136, %v349
  %v351 = vpop.f32.mrb[0].mxu0
  %352 = vmatprep.mubr.bf16.mxu0 %v74
  %353 = vmatmul.mubr.bf16.gmra.mrb[0].mxu0 %v73
  %v354 = vpop.f32.mrb[0].mxu0
  %v355 = vadd.f32 %v136, %v354
  %v356 = vpop.f32.mrb[0].mxu0
  %v357 = vpop.f32.mrb[0].mxu0
  %v358 = vadd.f32 %v136, %v357
  %v359 = vpop.f32.mrb[0].mxu0
  %360 = vmatprep.mubr.bf16.mxu0 %v78
  %361 = vmatmul.mubr.bf16.gmra.mrb[0].mxu0 %v77
  %v362 = vpop.f32.mrb[0].mxu0
  %v363 = vadd.f32 %v136, %v362
  %v364 = vpop.f32.mrb[0].mxu0
  %v365 = vpop.f32.mrb[0].mxu0
  %v366 = vadd.f32 %v136, %v365
  %v367 = vpop.f32.mrb[0].mxu0
  %368 = vdwg.mxu0
  %369 = vmatprep.subr.bf16.mxu0 0
  %370 = vmatpush1.bf16.msra.mxu0 %v254
  %371 = vmatprep.subr.bf16.mxu0 0
  %372 = vmatpush1.bf16.msra.mxu0 %v255
  %373 = vmatprep.subr.bf16.mxu0 0
  %374 = vmatpush1.bf16.msra.mxu0 %v256
  %375 = vmatprep.subr.bf16.mxu0 0
  %376 = vmatpush1.bf16.msra.mxu0 %v257
  %377 = vmatprep.subr.bf16.mxu0 0
  %378 = vmatpush1.bf16.msra.mxu0 %v258
  %379 = vmatprep.subr.bf16.mxu0 0
  %380 = vmatpush1.bf16.msra.mxu0 %v259
  %381 = vmatprep.subr.bf16.mxu0 0
  %382 = vmatpush1.bf16.msra.mxu0 %v260
  %383 = vmatprep.subr.bf16.mxu0 0
  %384 = vmatpush1.bf16.msra.mxu0 %v261
  %385 = vmatprep.subr.bf16.mxu0 0
  %386 = vmatpush1.bf16.msra.mxu0 %v302
  %387 = vmatprep.subr.bf16.mxu0 0
  %388 = vmatpush1.bf16.msra.mxu0 0
  %389 = vmatprep.subr.bf16.mxu0 0
  %390 = vmatpush1.bf16.msra.mxu0 0
  %391 = vmatprep.subr.bf16.mxu0 0
  %392 = vmatpush1.bf16.msra.mxu0 0
  %393 = vmatprep.subr.bf16.mxu0 0
  %394 = vmatpush1.bf16.msra.mxu0 0
  %395 = vmatprep.subr.bf16.mxu0 0
  %396 = vmatpush1.bf16.msra.mxu0 0
  %397 = vmatprep.subr.bf16.mxu0 0
  %398 = vmatpush1.bf16.msra.mxu0 0
  %399 = vmatprep.subr.bf16.mxu0 0
  %400 = vmatpush1.bf16.msra.mxu0 0
  %401 = vmatprep.mubr.bf16.mxu0 %v289
  %402 = vmatmul.mubr.bf16.gmra.mrb[0].mxu0 %v67
  %v403 = vpop.f32.mrb[0].mxu0
  %v404 = vadd.f32 %v339, %v403
  %v405 = vpop.f32.mrb[0].mxu0
  %v406 = vpop.f32.mrb[0].mxu0
  %v407 = vadd.f32 %v342, %v406
  %v408 = vpop.f32.mrb[0].mxu0
  %409 = vmatprep.mubr.bf16.mxu0 %v292
  %410 = vmatmul.mubr.bf16.gmra.mrb[0].mxu0 %v71
  %v411 = vpop.f32.mrb[0].mxu0
  %v412 = vadd.f32 %v347, %v411
  %v413 = vpop.f32.mrb[0].mxu0
  %v414 = vpop.f32.mrb[0].mxu0
  %v415 = vadd.f32 %v350, %v414
  %v416 = vpop.f32.mrb[0].mxu0
  %417 = vmatprep.mubr.bf16.mxu0 %v295
  %418 = vmatmul.mubr.bf16.gmra.mrb[0].mxu0 %v75
  %v419 = vpop.f32.mrb[0].mxu0
  %v420 = vadd.f32 %v355, %v419
  %v421 = vpop.f32.mrb[0].mxu0
  %v422 = vpop.f32.mrb[0].mxu0
  %v423 = vadd.f32 %v358, %v422
  %v424 = vpop.f32.mrb[0].mxu0
  %425 = vmatprep.mubr.bf16.mxu0 %v298
  %426 = vmatmul.mubr.bf16.gmra.mrb[0].mxu0 %v79
  %v427 = vpop.f32.mrb[0].mxu0
  %v428 = vadd.f32 %v363, %v427
  %v429 = vpop.f32.mrb[0].mxu0
  %v430 = vpop.f32.mrb[0].mxu0
  %v431 = vadd.f32 %v366, %v430
  %v432 = vpop.f32.mrb[0].mxu0
  %433 = vdwg.mxu0
  %v434 = vmax.f32 %v404, 0.0
  %v435 = vmax.f32 %v407, 0.0
  %v436 = vmax.f32 %v412, 0.0
  %v437 = vmax.f32 %v415, 0.0
  %v438 = vmax.f32 %v420, 0.0
  %v439 = vmax.f32 %v423, 0.0
  %v440 = vmax.f32 %v428, 0.0
  %v441 = vmax.f32 %v431, 0.0
  %v442 = vpack.c.bf16 %v435, %v434
  %v443 = vpack.c.bf16 %v437, %v436
  %v444 = vpack.c.bf16 %v439, %v438
  %v445 = vpack.c.bf16 %v441, %v440
  %v446 = vld [vmem:[%s3] sm:$0xf]
  %v447 = vld [vmem:[%s3 + $0x4] sm:$0xf]
  %v448 = vld [vmem:[%s3 + $0x8] sm:$0xf]
  %v449 = vld [vmem:[%s3 + $0xc] sm:$0xf]
  %v450 = vld [vmem:[%s3 + $0x10] sm:$0xf]
  %v451 = vld [vmem:[%s3 + $0x14] sm:$0xf]
  %v452 = vld [vmem:[%s3 + $0x18] sm:$0xf]
  %v453 = vld [vmem:[%s3 + $0x1c] sm:$0xf]
  %v454 = vld [vmem:[%s4] sm:$0x1]
  %v456 = vlaneseq
  %v457 = vshrl.u32 %v456, 7
  %v458 = vsub.s32 0, %v457
  %v459 = vrot.slane %v454, %v458
  %v469 = vunpack.c.l.b16 %v446
  %v470 = vunpack.c.l.b16 %v447
  %v471 = vunpack.c.l.b16 %v448
  %v472 = vunpack.c.l.b16 %v449
  %v473 = vunpack.c.l.b16 %v450
  %v474 = vunpack.c.l.b16 %v451
  %v475 = vunpack.c.l.b16 %v452
  %v476 = vunpack.c.l.b16 %v453
  %v477 = vpack.c.b16 %v470, %v469
  %v478 = vpack.c.b16 %v472, %v471
  %v479 = vpack.c.b16 %v474, %v473
  %v480 = vpack.c.b16 %v476, %v475
  %vm485 = vcmask 523264
  %v487 = vsel %vm485, %v442, 0
  %v490 = vsel %vm485, %v443, 0
  %v493 = vsel %vm485, %v444, 0
  %v496 = vsel %vm485, %v445, 0
  %498 = vmatprep.subr.bf16.mxu0 0
  %499 = vmatpush1.bf16.msra.mxu0 %v477
  %500 = vmatprep.subr.bf16.mxu0 0
  %501 = vmatpush1.bf16.msra.mxu0 %v478
  %502 = vmatprep.subr.bf16.mxu0 0
  %503 = vmatpush1.bf16.msra.mxu0 %v479
  %504 = vmatprep.subr.bf16.mxu0 0
  %505 = vmatpush1.bf16.msra.mxu0 %v480
  %506 = vmatprep.subr.bf16.mxu0 0
  %507 = vmatpush1.bf16.msra.mxu0 0
  %508 = vmatprep.subr.bf16.mxu0 0
  %509 = vmatpush1.bf16.msra.mxu0 0
  %510 = vmatprep.subr.bf16.mxu0 0
  %511 = vmatpush1.bf16.msra.mxu0 0
  %512 = vmatprep.subr.bf16.mxu0 0
  %513 = vmatpush1.bf16.msra.mxu0 0
  %514 = vmatprep.subr.bf16.mxu0 0
  %515 = vmatpush1.bf16.msra.mxu0 0
  %516 = vmatprep.subr.bf16.mxu0 0
  %517 = vmatpush1.bf16.msra.mxu0 0
  %518 = vmatprep.subr.bf16.mxu0 0
  %519 = vmatpush1.bf16.msra.mxu0 0
  %520 = vmatprep.subr.bf16.mxu0 0
  %521 = vmatpush1.bf16.msra.mxu0 0
  %522 = vmatprep.subr.bf16.mxu0 0
  %523 = vmatpush1.bf16.msra.mxu0 0
  %524 = vmatprep.subr.bf16.mxu0 0
  %525 = vmatpush1.bf16.msra.mxu0 0
  %526 = vmatprep.subr.bf16.mxu0 0
  %527 = vmatpush1.bf16.msra.mxu0 0
  %528 = vmatprep.subr.bf16.mxu0 0
  %529 = vmatpush1.bf16.msra.mxu0 0
  %530 = vmatprep.mubr.bf16.mxu0 0
  %531 = vmatmul.mubr.bf16.gmra.mrb[0].mxu0 %v487
  %v532 = vpop.f32.mrb[0].mxu0
  %v533 = vadd.f32 %v459, %v532
  %v534 = vpop.f32.mrb[0].mxu0
  %v535 = vpop.f32.mrb[0].mxu0
  %v536 = vadd.f32 %v459, %v535
  %v537 = vpop.f32.mrb[0].mxu0
  %538 = vmatprep.mubr.bf16.mxu0 0
  %539 = vmatmul.mubr.bf16.gmra.mrb[0].mxu0 %v490
  %v540 = vpop.f32.mrb[0].mxu0
  %v541 = vadd.f32 %v459, %v540
  %v542 = vpop.f32.mrb[0].mxu0
  %v543 = vpop.f32.mrb[0].mxu0
  %v544 = vadd.f32 %v459, %v543
  %v545 = vpop.f32.mrb[0].mxu0
  %546 = vmatprep.mubr.bf16.mxu0 0
  %547 = vmatmul.mubr.bf16.gmra.mrb[0].mxu0 %v493
  %v548 = vpop.f32.mrb[0].mxu0
  %v549 = vadd.f32 %v459, %v548
  %v550 = vpop.f32.mrb[0].mxu0
  %v551 = vpop.f32.mrb[0].mxu0
  %v552 = vadd.f32 %v459, %v551
  %v553 = vpop.f32.mrb[0].mxu0
  %554 = vmatprep.mubr.bf16.mxu0 0
  %555 = vmatmul.mubr.bf16.gmra.mrb[0].mxu0 %v496
  %v556 = vpop.f32.mrb[0].mxu0
  %v557 = vadd.f32 %v459, %v556
  %v558 = vpop.f32.mrb[0].mxu0
  %v559 = vpop.f32.mrb[0].mxu0
  %v560 = vadd.f32 %v459, %v559
  %v561 = vpop.f32.mrb[0].mxu0
  %562 = vdwg.mxu0
  %v563 = vmax.f32 %v533, 0.0
  %v564 = vmax.f32 %v536, 0.0
  %v565 = vmax.f32 %v541, 0.0
  %v566 = vmax.f32 %v544, 0.0
  %v567 = vmax.f32 %v549, 0.0
  %v568 = vmax.f32 %v552, 0.0
  %v569 = vmax.f32 %v557, 0.0
  %v570 = vmax.f32 %v560, 0.0
  %v571 = vpack.c.bf16 %v564, %v563
  %v572 = vpack.c.bf16 %v566, %v565
  %v573 = vpack.c.bf16 %v568, %v567
  %v574 = vpack.c.bf16 %v570, %v569
  %v575 = vld [vmem:[%s5] sm:$0xf]
  %v576 = vld [vmem:[%s5 + $0x4] sm:$0xf]
  %v577 = vld [vmem:[%s5 + $0x8] sm:$0xf]
  %v578 = vld [vmem:[%s5 + $0xc] sm:$0xf]
  %v579 = vld [vmem:[%s5 + $0x10] sm:$0xf]
  %v580 = vld [vmem:[%s5 + $0x14] sm:$0xf]
  %v581 = vld [vmem:[%s5 + $0x18] sm:$0xf]
  %v582 = vld [vmem:[%s5 + $0x1c] sm:$0xf]
  %v583 = vld [vmem:[%s6] sm:$0x1]
  %v585 = vlaneseq
  %v586 = vshrl.u32 %v585, 7
  %v587 = vsub.s32 0, %v586
  %v588 = vrot.slane %v583, %v587
  %v598 = vunpack.c.l.b16 %v575
  %v599 = vunpack.c.l.b16 %v576
  %v600 = vunpack.c.l.b16 %v577
  %v601 = vunpack.c.l.b16 %v578
  %v602 = vunpack.c.l.b16 %v579
  %v603 = vunpack.c.l.b16 %v580
  %v604 = vunpack.c.l.b16 %v581
  %v605 = vunpack.c.l.b16 %v582
  %v606 = vpack.c.b16 %v599, %v598
  %v607 = vpack.c.b16 %v601, %v600
  %v608 = vpack.c.b16 %v603, %v602
  %v609 = vpack.c.b16 %v605, %v604
  %v615 = vsel %vm485, %v571, 0
  %v618 = vsel %vm485, %v572, 0
  %v621 = vsel %vm485, %v573, 0
  %v624 = vsel %vm485, %v574, 0
  %626 = vmatprep.subr.bf16.mxu0 0
  %627 = vmatpush1.bf16.msra.mxu0 %v606
  %628 = vmatprep.subr.bf16.mxu0 0
  %629 = vmatpush1.bf16.msra.mxu0 %v607
  %630 = vmatprep.subr.bf16.mxu0 0
  %631 = vmatpush1.bf16.msra.mxu0 %v608
  %632 = vmatprep.subr.bf16.mxu0 0
  %633 = vmatpush1.bf16.msra.mxu0 %v609
  %634 = vmatprep.subr.bf16.mxu0 0
  %635 = vmatpush1.bf16.msra.mxu0 0
  %636 = vmatprep.subr.bf16.mxu0 0
  %637 = vmatpush1.bf16.msra.mxu0 0
  %638 = vmatprep.subr.bf16.mxu0 0
  %639 = vmatpush1.bf16.msra.mxu0 0
  %640 = vmatprep.subr.bf16.mxu0 0
  %641 = vmatpush1.bf16.msra.mxu0 0
  %642 = vmatprep.subr.bf16.mxu0 0
  %643 = vmatpush1.bf16.msra.mxu0 0
  %644 = vmatprep.subr.bf16.mxu0 0
  %645 = vmatpush1.bf16.msra.mxu0 0
  %646 = vmatprep.subr.bf16.mxu0 0
  %647 = vmatpush1.bf16.msra.mxu0 0
  %648 = vmatprep.subr.bf16.mxu0 0
  %649 = vmatpush1.bf16.msra.mxu0 0
  %650 = vmatprep.subr.bf16.mxu0 0
  %651 = vmatpush1.bf16.msra.mxu0 0
  %652 = vmatprep.subr.bf16.mxu0 0
  %653 = vmatpush1.bf16.msra.mxu0 0
  %654 = vmatprep.subr.bf16.mxu0 0
  %655 = vmatpush1.bf16.msra.mxu0 0
  %656 = vmatprep.subr.bf16.mxu0 0
  %657 = vmatpush1.bf16.msra.mxu0 0
  %658 = vmatprep.mubr.bf16.mxu0 0
  %659 = vmatmul.mubr.bf16.gmra.mrb[0].mxu0 %v615
  %v660 = vpop.f32.mrb[0].mxu0
  %v661 = vadd.f32 %v588, %v660
  %v662 = vpop.f32.mrb[0].mxu0
  %v663 = vpop.f32.mrb[0].mxu0
  %v664 = vadd.f32 %v588, %v663
  %v665 = vpop.f32.mrb[0].mxu0
  %666 = vmatprep.mubr.bf16.mxu0 0
  %667 = vmatmul.mubr.bf16.gmra.mrb[0].mxu0 %v618
  %v668 = vpop.f32.mrb[0].mxu0
  %v669 = vadd.f32 %v588, %v668
  %v670 = vpop.f32.mrb[0].mxu0
  %v671 = vpop.f32.mrb[0].mxu0
  %v672 = vadd.f32 %v588, %v671
  %v673 = vpop.f32.mrb[0].mxu0
  %674 = vmatprep.mubr.bf16.mxu0 0
  %675 = vmatmul.mubr.bf16.gmra.mrb[0].mxu0 %v621
  %v676 = vpop.f32.mrb[0].mxu0
  %v677 = vadd.f32 %v588, %v676
  %v678 = vpop.f32.mrb[0].mxu0
  %v679 = vpop.f32.mrb[0].mxu0
  %v680 = vadd.f32 %v588, %v679
  %v681 = vpop.f32.mrb[0].mxu0
  %682 = vmatprep.mubr.bf16.mxu0 0
  %683 = vmatmul.mubr.bf16.gmra.mrb[0].mxu0 %v624
  %v684 = vpop.f32.mrb[0].mxu0
  %v685 = vadd.f32 %v588, %v684
  %v686 = vpop.f32.mrb[0].mxu0
  %v687 = vpop.f32.mrb[0].mxu0
  %v688 = vadd.f32 %v588, %v687
  %v689 = vpop.f32.mrb[0].mxu0
  %690 = vdwg.mxu0
  %v691 = vmax.f32 %v661, 0.0
  %v692 = vmax.f32 %v664, 0.0
  %v693 = vmax.f32 %v669, 0.0
  %v694 = vmax.f32 %v672, 0.0
  %v695 = vmax.f32 %v677, 0.0
  %v696 = vmax.f32 %v680, 0.0
  %v697 = vmax.f32 %v685, 0.0
  %v698 = vmax.f32 %v688, 0.0
  %v699 = vpack.c.bf16 %v692, %v691
  %v700 = vpack.c.bf16 %v694, %v693
  %v701 = vpack.c.bf16 %v696, %v695
  %v702 = vpack.c.bf16 %v698, %v697
  %v703 = vld [vmem:[%s7] sm:$0xf]
  %v704 = vld [vmem:[%s7 + $0x4] sm:$0xf]
  %v705 = vld [vmem:[%s7 + $0x8] sm:$0xf]
  %v706 = vld [vmem:[%s7 + $0xc] sm:$0xf]
  %v707 = vld [vmem:[%s7 + $0x10] sm:$0xf]
  %v708 = vld [vmem:[%s7 + $0x14] sm:$0xf]
  %v709 = vld [vmem:[%s7 + $0x18] sm:$0xf]
  %v710 = vld [vmem:[%s7 + $0x1c] sm:$0xf]
  %v711 = vld [vmem:[%s8] sm:$0x1]
  %v713 = vlaneseq
  %v714 = vshrl.u32 %v713, 7
  %v715 = vsub.s32 0, %v714
  %v716 = vrot.slane %v711, %v715
  %v726 = vunpack.c.l.b16 %v703
  %v727 = vunpack.c.l.b16 %v704
  %v728 = vunpack.c.l.b16 %v705
  %v729 = vunpack.c.l.b16 %v706
  %v730 = vunpack.c.l.b16 %v707
  %v731 = vunpack.c.l.b16 %v708
  %v732 = vunpack.c.l.b16 %v709
  %v733 = vunpack.c.l.b16 %v710
  %v734 = vpack.c.b16 %v727, %v726
  %v735 = vpack.c.b16 %v729, %v728
  %v736 = vpack.c.b16 %v731, %v730
  %v737 = vpack.c.b16 %v733, %v732
  %v743 = vsel %vm485, %v699, 0
  %v746 = vsel %vm485, %v700, 0
  %v749 = vsel %vm485, %v701, 0
  %v752 = vsel %vm485, %v702, 0
  %754 = vmatprep.subr.bf16.mxu0 0
  %755 = vmatpush1.bf16.msra.mxu0 %v734
  %756 = vmatprep.subr.bf16.mxu0 0
  %757 = vmatpush1.bf16.msra.mxu0 %v735
  %758 = vmatprep.subr.bf16.mxu0 0
  %759 = vmatpush1.bf16.msra.mxu0 %v736
  %760 = vmatprep.subr.bf16.mxu0 0
  %761 = vmatpush1.bf16.msra.mxu0 %v737
  %762 = vmatprep.subr.bf16.mxu0 0
  %763 = vmatpush1.bf16.msra.mxu0 0
  %764 = vmatprep.subr.bf16.mxu0 0
  %765 = vmatpush1.bf16.msra.mxu0 0
  %766 = vmatprep.subr.bf16.mxu0 0
  %767 = vmatpush1.bf16.msra.mxu0 0
  %768 = vmatprep.subr.bf16.mxu0 0
  %769 = vmatpush1.bf16.msra.mxu0 0
  %770 = vmatprep.subr.bf16.mxu0 0
  %771 = vmatpush1.bf16.msra.mxu0 0
  %772 = vmatprep.subr.bf16.mxu0 0
  %773 = vmatpush1.bf16.msra.mxu0 0
  %774 = vmatprep.subr.bf16.mxu0 0
  %775 = vmatpush1.bf16.msra.mxu0 0
  %776 = vmatprep.subr.bf16.mxu0 0
  %777 = vmatpush1.bf16.msra.mxu0 0
  %778 = vmatprep.subr.bf16.mxu0 0
  %779 = vmatpush1.bf16.msra.mxu0 0
  %780 = vmatprep.subr.bf16.mxu0 0
  %781 = vmatpush1.bf16.msra.mxu0 0
  %782 = vmatprep.subr.bf16.mxu0 0
  %783 = vmatpush1.bf16.msra.mxu0 0
  %784 = vmatprep.subr.bf16.mxu0 0
  %785 = vmatpush1.bf16.msra.mxu0 0
  %786 = vmatprep.mubr.bf16.mxu0 0
  %787 = vmatmul.mubr.bf16.gmra.mrb[0].mxu0 %v743
  %v788 = vpop.f32.mrb[0].mxu0
  %v789 = vadd.f32 %v716, %v788
  %v790 = vpop.f32.mrb[0].mxu0
  %v791 = vpop.f32.mrb[0].mxu0
  %v792 = vadd.f32 %v716, %v791
  %v793 = vpop.f32.mrb[0].mxu0
  %794 = vmatprep.mubr.bf16.mxu0 0
  %795 = vmatmul.mubr.bf16.gmra.mrb[0].mxu0 %v746
  %v796 = vpop.f32.mrb[0].mxu0
  %v797 = vadd.f32 %v716, %v796
  %v798 = vpop.f32.mrb[0].mxu0
  %v799 = vpop.f32.mrb[0].mxu0
  %v800 = vadd.f32 %v716, %v799
  %v801 = vpop.f32.mrb[0].mxu0
  %802 = vmatprep.mubr.bf16.mxu0 0
  %803 = vmatmul.mubr.bf16.gmra.mrb[0].mxu0 %v749
  %v804 = vpop.f32.mrb[0].mxu0
  %v805 = vadd.f32 %v716, %v804
  %v806 = vpop.f32.mrb[0].mxu0
  %v807 = vpop.f32.mrb[0].mxu0
  %v808 = vadd.f32 %v716, %v807
  %v809 = vpop.f32.mrb[0].mxu0
  %810 = vmatprep.mubr.bf16.mxu0 0
  %811 = vmatmul.mubr.bf16.gmra.mrb[0].mxu0 %v752
  %v812 = vpop.f32.mrb[0].mxu0
  %v813 = vadd.f32 %v716, %v812
  %v814 = vpop.f32.mrb[0].mxu0
  %v815 = vpop.f32.mrb[0].mxu0
  %v816 = vadd.f32 %v716, %v815
  %v817 = vpop.f32.mrb[0].mxu0
  %818 = vdwg.mxu0
  %v819 = vsub.f32 0.0, %v789
  %v820 = vsub.f32 0.0, %v792
  %v821 = vsub.f32 0.0, %v797
  %v822 = vsub.f32 0.0, %v800
  %v823 = vsub.f32 0.0, %v805
  %v824 = vsub.f32 0.0, %v808
  %v825 = vsub.f32 0.0, %v813
  %v826 = vsub.f32 0.0, %v816
  %v827 = vmul.f32 %v819, 1.442695
  %v828 = vpow.pop %v827
  %v829 = vmul.f32 %v820, 1.442695
  %v830 = vpow.pop %v829
  %v831 = vmul.f32 %v821, 1.442695
  %v832 = vpow.pop %v831
  %v833 = vmul.f32 %v822, 1.442695
  %v834 = vpow.pop %v833
  %v835 = vmul.f32 %v823, 1.442695
  %v836 = vpow.pop %v835
  %v837 = vmul.f32 %v824, 1.442695
  %v838 = vpow.pop %v837
  %v839 = vmul.f32 %v825, 1.442695
  %v840 = vpow.pop %v839
  %v841 = vmul.f32 %v826, 1.442695
  %v842 = vpow.pop %v841
  %v843 = vadd.f32 %v828, 1.0
  %v844 = vadd.f32 %v830, 1.0
  %v845 = vadd.f32 %v832, 1.0
  %v846 = vadd.f32 %v834, 1.0
  %v847 = vadd.f32 %v836, 1.0
  %v848 = vadd.f32 %v838, 1.0
  %v849 = vadd.f32 %v840, 1.0
  %v850 = vadd.f32 %v842, 1.0
  %v851 = vrcp.pop %v843
  %v852 = vrcp.pop %v844
  %v853 = vrcp.pop %v845
  %v854 = vrcp.pop %v846
  %v855 = vrcp.pop %v847
  %v856 = vrcp.pop %v848
  %v857 = vrcp.pop %v849
  %v858 = vrcp.pop %v850
  %vm859 = vcmask 80896
  %860 = vst.msk [vmem:[%s9] sm:$0xff] %vm859, %v851
  %861 = vst.msk [vmem:[%s9 + $0x8] sm:$0xff] %vm859, %v852
  %862 = vst.msk [vmem:[%s9 + $0x10] sm:$0xff] %vm859, %v853
  %863 = vst.msk [vmem:[%s9 + $0x18] sm:$0xff] %vm859, %v854
  %864 = vst.msk [vmem:[%s9 + $0x20] sm:$0xff] %vm859, %v855
  %865 = vst.msk [vmem:[%s9 + $0x28] sm:$0xff] %vm859, %v856
  %866 = vst.msk [vmem:[%s9 + $0x30] sm:$0xff] %vm859, %v857
  %867 = vst.msk [vmem:[%s9 + $0x38] sm:$0xff] %vm859, %v858
  // Predicated region
  $region38: #{tpu_custom_call.1} parent=0 // pred_check
    _
  $region39: #{tpu_custom_call.1} parent=0 // pred_check_branch
    %869 = sbr.rel (0) target = $region41
  $region40: #{tpu_custom_call.1} parent=0 // pred_region
    _
  $region41: #{tpu_custom_call.1} parent=0 // pred_fallthru
    _
  // Predicated region
  $region42: #{tpu_custom_call.1} parent=0 // pred_check
    _
  $region43: #{tpu_custom_call.1} parent=0 // pred_check_branch
    %871 = sbr.rel (0) target = $region45
  $region44: #{tpu_custom_call.1} parent=0 // pred_region
    _
  $region45: #{tpu_custom_call.1} parent=0 // pred_fallthru
    _

</llo_original>
